<compile_context>
chip_gen: v7x
topology: tpu7x:2x2x1
jax: 0.10.0
libtpu: 0.0.40
codegen_flags: <defaults>
</compile_context>

<pallas_src>
import functools

import jax
import jax.numpy as jnp
from jax import lax
from jax.experimental import pallas as pl
from jax.experimental.pallas import tpu as pltpu


def _round_up(x, m):
    return ((x + m - 1) // m) * m


def _compute_rows(x_ref, w_ref, b_ref, o_ref, r0, nrows):
    """Reduce over L and apply Linear+ReLU for rows [r0, r0+nrows) of the tile."""
    L = x_ref.shape[0]
    Cp = x_ref.shape[2]
    rows = pl.ds(r0, nrows)

    # Pass 1 (streamed over L, static unroll): sum / max / min.
    x0 = x_ref[0, rows, :].astype(jnp.float32)
    s, mx, mn = x0, x0, x0
    for l in range(1, L):
        xl = x_ref[l, rows, :].astype(jnp.float32)
        s = s + xl
        mx = jnp.maximum(mx, xl)
        mn = jnp.minimum(mn, xl)
    mean = s * jnp.float32(1.0 / L)

    # Pass 2: two-pass unbiased std (ddof=1), matching torch.std and avoiding the
    # catastrophic cancellation of the single-pass sum-of-squares formula. The tile
    # is VMEM-resident so the extra reads are cheap.
    if L > 1:
        ssd = jnp.zeros_like(s)
        for l in range(L):
            d = x_ref[l, rows, :].astype(jnp.float32) - mean
            ssd = ssd + d * d
        std = jnp.sqrt(ssd * jnp.float32(1.0 / (L - 1)))
    else:
        # torch.std (unbiased) of a single sample is NaN.
        std = jnp.full_like(s, jnp.nan)

    # Linear(5*Cp -> OP) as 5 accumulated MXU dots against static weight slices
    # (no lane-axis concatenate). Order matches ['sum','max','min','std','mean'].
    aggs = (s, mx, mn, std, mean)
    acc = jnp.dot(aggs[0], w_ref[pl.ds(0, Cp), :], preferred_element_type=jnp.float32)
    for k in range(1, 5):
        acc = acc + jnp.dot(
            aggs[k], w_ref[pl.ds(k * Cp, Cp), :], preferred_element_type=jnp.float32
        )
    acc = acc + b_ref[...]                                  # broadcast (1, OP)
    o_ref[rows, :] = jnp.maximum(acc, 0.0).astype(o_ref.dtype)


def rank_aggregator_kernel(x_ref, w_ref, b_ref, o_ref, *, sub_rows):
    # x_ref: (L, TN, Cp)   w_ref: (5*Cp, OP)   b_ref: (1, OP)   o_ref: (TN, OP)
    tn = x_ref.shape[1]
    n_sub = tn // sub_rows
    if n_sub <= 1:
        _compute_rows(x_ref, w_ref, b_ref, o_ref, 0, tn)
    else:
        # Inner fori_loop bounds the accumulators' live ranges to `sub_rows` rows so
        # they stay (mostly) vreg-resident instead of spilling to VMEM every L-step.
        def body(i, carry):
            r0 = pl.multiple_of(i * sub_rows, sub_rows)
            _compute_rows(x_ref, w_ref, b_ref, o_ref, r0, sub_rows)
            return carry

        lax.fori_loop(0, n_sub, body, 0, unroll=False)


def rank_aggregator(x_stacked, w, b, *, tn=None):
    """x_stacked: (L, N, C) f32; w: (5*C, out); b: (1, out) or (out,) -> (N, out) f32."""
    L, N, C = x_stacked.shape
    out_channels = w.shape[1]
    b = b.reshape(1, out_channels)

    # ---- Lane packing: fold `pf` consecutive node rows into one 128-wide lane row. --
    pf = 1
    if C < 128 and 128 % C == 0 and N % (128 // C) == 0:
        pf = 128 // C
    if pf > 1:
        x_k = x_stacked.reshape(L, N // pf, pf * C)          # free row-major reshape
        eye = jnp.eye(pf, dtype=w.dtype)
        # Block-diagonal repack of each aggregation's (C, out) slice -> (pf*C, pf*out).
        w_k = jnp.concatenate(
            [jnp.kron(eye, w[k * C:(k + 1) * C, :]) for k in range(5)], axis=0
        )
        b_k = jnp.tile(b, (1, pf))
    else:
        # TODO(synk): when N is not a multiple of 128//C we fall back to the unpacked
        # (lane-sparse) layout instead of padding the whole input through HBM.
        x_k, w_k, b_k = x_stacked, w, b

    Np, Cp = x_k.shape[1], x_k.shape[2]
    OP = w_k.shape[1]

    # VMEM sizes actually occupied: the minor dim pads to full 128-lane vregs.
    Cp_l = _round_up(Cp, 128)
    OP_l = _round_up(OP, 128)

    # ---- Generation-aware tile size / VMEM budget. ----
    try:
        vmem_cap = int(pltpu.get_tpu_info().vmem_capacity_bytes)
    except Exception:
        vmem_cap = 64 * 1024 * 1024               # conservative default (v7x VMEM)
    small_vmem = vmem_cap <= 64 * 1024 * 1024     # v7x: 64 MiB, 2 TCs; v5e/v6e: 128 MiB
    in_buf_target = (3 if small_vmem else 8) * 1024 * 1024   # per input-tile buffer

    SUB = 256                                     # inner sub-chunk rows
    if tn is None:
        rows = in_buf_target // max(1, L * Cp_l * 4)
        tn = max(SUB, (rows // SUB) * SUB)
        tn = min(tn, 4096)
    if small_vmem and Np > 16:
        # v7x has two TensorCores: keep >= 2 grid steps so neither core idles.
        tn = min(tn, max(8, _round_up((Np + 1) // 2, 8)))
    if tn >= Np:
        tn = Np                                   # full-dim block (any size allowed)
    else:
        tn = max(8, (tn // 8) * 8)
    sub_rows = SUB if (tn > SUB and tn % SUB == 0) else tn

    # No wrapper-side pad: ragged last tile is handled by Pallas boundary masking
    # (all compute is per-row, so boundary garbage rows never affect valid rows).
    n_grid = pl.cdiv(Np, tn)

    # Explicit VMEM budget with lane-padded sizes + margin for compiler temporaries.
    footprint = (
        2 * L * tn * Cp_l * 4                     # double-buffered input tiles
        + 2 * tn * OP_l * 4                       # double-buffered output tiles
        + _round_up(5 * Cp, 8) * OP_l * 4         # resident weights
        + 8 * OP_l * 4                            # resident bias (sublane-padded)
        + 6 * sub_rows * Cp_l * 4                 # live/spilled per-chunk accumulators
        + 2 * 1024 * 1024                         # compiler scratch margin
    )
    if small_vmem:
        vmem_limit = min(max(footprint, 16 * 1024 * 1024), 40 * 1024 * 1024)
    else:
        vmem_limit = min(max(footprint, 32 * 1024 * 1024), 96 * 1024 * 1024)

    # TODO(synk): on v5e, consider pipeline_mode=pl.Buffered(3) on the x spec (DMA is
    # the long pole there); left at the default double-buffering for portability.
    out_p = pl.pallas_call(
        functools.partial(rank_aggregator_kernel, sub_rows=sub_rows),
        out_shape=jax.ShapeDtypeStruct((Np, OP), jnp.float32),
        grid=(n_grid,),
        in_specs=[
            pl.BlockSpec((L, tn, Cp), lambda i: (0, i, 0)),        # N-tiled input
            pl.BlockSpec((5 * Cp, OP), lambda i: (0, 0)),          # resident weights
            pl.BlockSpec((1, OP), lambda i: (0, 0)),               # resident bias
        ],
        out_specs=pl.BlockSpec((tn, OP), lambda i: (i, 0)),
        compiler_params=pltpu.CompilerParams(
            # TODO(synk): verify via trace that "parallel" shards this axis across both
            # v7x TensorCores; if not, switch to pltpu.CORE_PARALLEL on a core axis.
            dimension_semantics=("parallel",),
            vmem_limit_bytes=int(vmem_limit),
        ),
    )(x_k, w_k, b_k)

    if pf > 1:
        out_p = out_p.reshape(N, out_channels)    # free row-major reshape back
    return out_p


def rank_aggregator_ref(x_stacked, w, b):
    """Pure-JAX reference mirroring the PyTorch module (two-pass unbiased std)."""
    L = x_stacked.shape[0]
    s = jnp.sum(x_stacked, axis=0)
    mx = jnp.max(x_stacked, axis=0)
    mn = jnp.min(x_stacked, axis=0)
    mean = s / L
    std = jnp.sqrt(jnp.sum((x_stacked - mean[None]) ** 2, axis=0) / (L - 1))
    feat = jnp.concatenate([s, mx, mn, std, mean], axis=-1)
    return jnp.maximum(feat @ w + b.reshape(1, -1), 0.0)


if __name__ == "__main__":
    # Small deterministic example consistent with the module: a list of L node-feature
    # tensors of shape (N, in_channels), stacked along axis 0.
    L = 4
    N = 8
    in_channels = 32
    out_channels = 32

    key = jax.random.PRNGKey(0)
    kx, kw, kb = jax.random.split(key, 3)

    x_stacked = jax.random.normal(kx, (L, N, in_channels), dtype=jnp.float32)
    w = jax.random.normal(kw, (5 * in_channels, out_channels), dtype=jnp.float32) * 0.05
    b = jax.random.normal(kb, (1, out_channels), dtype=jnp.float32) * 0.05

    out = jax.block_until_ready(rank_aggregator(x_stacked, w, b))
    ref = rank_aggregator_ref(x_stacked, w, b)
    assert out.shape == (N, out_channels)
    assert jnp.allclose(out, ref, atol=1e-4, rtol=1e-4)

    # Coverage check for the tiled / ragged-boundary / inner-fori paths (still small).
    N2 = 4104                       # Np = 1026 packed rows; tn=512 -> 3 tiles, ragged
    x2 = jax.random.normal(jax.random.PRNGKey(1), (L, N2, in_channels), jnp.float32)
    out2 = jax.block_until_ready(rank_aggregator(x2, w, b, tn=512))
    ref2 = rank_aggregator_ref(x2, w, b)
    assert out2.shape == (N2, out_channels)
    assert jnp.allclose(out2, ref2, atol=1e-4, rtol=1e-4)

    print("KERNEL_OK")
</pallas_src>

<mosaic_0001>
module attributes {stable_mosaic.version = 11 : i64} {
  func.func @rank_aggregator_kernel(%arg0: i32, %arg1: memref<4x2x128xf32, #tpu.memory_space<vmem>>, %arg2: memref<640x128xf32, #tpu.memory_space<vmem>>, %arg3: memref<1x128xf32, #tpu.memory_space<vmem>>, %arg4: memref<2x128xf32, #tpu.memory_space<vmem>>) attributes {dimension_semantics = [#tpu.dimension_semantics<parallel>], iteration_bounds = array<i64: 1>, scalar_prefetch = 0 : i64, scratch_operands = 0 : i64, tpu.core_type = #tpu.core_type<tc>, window_params = [{transform_indices = @transform_0, window_bounds = array<i64: 4, 2, 128>}, {pipeline_mode = #tpu.pipeline_mode<synchronous>, transform_indices = @transform_1, window_bounds = array<i64: 640, 128>}, {pipeline_mode = #tpu.pipeline_mode<synchronous>, transform_indices = @transform_2, window_bounds = array<i64: 1, 128>}, {transform_indices = @transform_3, window_bounds = array<i64: 2, 128>}]} {
    %c0 = arith.constant 0 : index
    %c0_0 = arith.constant 0 : index
    %c0_1 = arith.constant 0 : index
    %0 = vector.load %arg1[%c0, %c0_0, %c0_1] : memref<4x2x128xf32, #tpu.memory_space<vmem>>, vector<1x2x128xf32>
    %1 = vector.shape_cast %0 : vector<1x2x128xf32> to vector<2x128xf32>
    %c1 = arith.constant 1 : index
    %c0_2 = arith.constant 0 : index
    %c0_3 = arith.constant 0 : index
    %2 = vector.load %arg1[%c1, %c0_2, %c0_3] : memref<4x2x128xf32, #tpu.memory_space<vmem>>, vector<1x2x128xf32>
    %3 = vector.shape_cast %2 : vector<1x2x128xf32> to vector<2x128xf32>
    %4 = arith.addf %1, %3 : vector<2x128xf32>
    %5 = arith.maximumf %1, %3 : vector<2x128xf32>
    %6 = arith.minimumf %1, %3 : vector<2x128xf32>
    %c2 = arith.constant 2 : index
    %c0_4 = arith.constant 0 : index
    %c0_5 = arith.constant 0 : index
    %7 = vector.load %arg1[%c2, %c0_4, %c0_5] : memref<4x2x128xf32, #tpu.memory_space<vmem>>, vector<1x2x128xf32>
    %8 = vector.shape_cast %7 : vector<1x2x128xf32> to vector<2x128xf32>
    %9 = arith.addf %4, %8 : vector<2x128xf32>
    %10 = arith.maximumf %5, %8 : vector<2x128xf32>
    %11 = arith.minimumf %6, %8 : vector<2x128xf32>
    %c3 = arith.constant 3 : index
    %c0_6 = arith.constant 0 : index
    %c0_7 = arith.constant 0 : index
    %12 = vector.load %arg1[%c3, %c0_6, %c0_7] : memref<4x2x128xf32, #tpu.memory_space<vmem>>, vector<1x2x128xf32>
    %13 = vector.shape_cast %12 : vector<1x2x128xf32> to vector<2x128xf32>
    %14 = arith.addf %9, %13 : vector<2x128xf32>
    %15 = arith.maximumf %10, %13 : vector<2x128xf32>
    %16 = arith.minimumf %11, %13 : vector<2x128xf32>
    %cst = arith.constant 2.500000e-01 : f32
    %17 = vector.broadcast %cst : f32 to vector<2x128xf32>
    %18 = arith.mulf %14, %17 : vector<2x128xf32>
    %cst_8 = arith.constant 0.000000e+00 : f32
    %19 = vector.broadcast %cst_8 : f32 to vector<2x128xf32>
    %c0_9 = arith.constant 0 : index
    %c0_10 = arith.constant 0 : index
    %c0_11 = arith.constant 0 : index
    %20 = vector.load %arg1[%c0_9, %c0_10, %c0_11] : memref<4x2x128xf32, #tpu.memory_space<vmem>>, vector<1x2x128xf32>
    %21 = vector.shape_cast %20 : vector<1x2x128xf32> to vector<2x128xf32>
    %22 = arith.subf %21, %18 : vector<2x128xf32>
    %23 = arith.mulf %22, %22 : vector<2x128xf32>
    %24 = arith.addf %19, %23 : vector<2x128xf32>
    %c1_12 = arith.constant 1 : index
    %c0_13 = arith.constant 0 : index
    %c0_14 = arith.constant 0 : index
    %25 = vector.load %arg1[%c1_12, %c0_13, %c0_14] : memref<4x2x128xf32, #tpu.memory_space<vmem>>, vector<1x2x128xf32>
    %26 = vector.shape_cast %25 : vector<1x2x128xf32> to vector<2x128xf32>
    %27 = arith.subf %26, %18 : vector<2x128xf32>
    %28 = arith.mulf %27, %27 : vector<2x128xf32>
    %29 = arith.addf %24, %28 : vector<2x128xf32>
    %c2_15 = arith.constant 2 : index
    %c0_16 = arith.constant 0 : index
    %c0_17 = arith.constant 0 : index
    %30 = vector.load %arg1[%c2_15, %c0_16, %c0_17] : memref<4x2x128xf32, #tpu.memory_space<vmem>>, vector<1x2x128xf32>
    %31 = vector.shape_cast %30 : vector<1x2x128xf32> to vector<2x128xf32>
    %32 = arith.subf %31, %18 : vector<2x128xf32>
    %33 = arith.mulf %32, %32 : vector<2x128xf32>
    %34 = arith.addf %29, %33 : vector<2x128xf32>
    %c3_18 = arith.constant 3 : index
    %c0_19 = arith.constant 0 : index
    %c0_20 = arith.constant 0 : index
    %35 = vector.load %arg1[%c3_18, %c0_19, %c0_20] : memref<4x2x128xf32, #tpu.memory_space<vmem>>, vector<1x2x128xf32>
    %36 = vector.shape_cast %35 : vector<1x2x128xf32> to vector<2x128xf32>
    %37 = arith.subf %36, %18 : vector<2x128xf32>
    %38 = arith.mulf %37, %37 : vector<2x128xf32>
    %39 = arith.addf %34, %38 : vector<2x128xf32>
    %cst_21 = arith.constant 0.333333343 : f32
    %40 = vector.broadcast %cst_21 : f32 to vector<2x128xf32>
    %41 = arith.mulf %39, %40 : vector<2x128xf32>
    %42 = math.sqrt %41 : vector<2x128xf32>
    %c0_22 = arith.constant 0 : index
    %c0_23 = arith.constant 0 : index
    %43 = vector.load %arg2[%c0_22, %c0_23] : memref<640x128xf32, #tpu.memory_space<vmem>>, vector<128x128xf32>
    %cst_24 = arith.constant dense<0.000000e+00> : vector<2x128xf32>
    %44 = tpu.matmul %14, %43, %cst_24 {dimension_numbers = #tpu.dot_dimension_numbers<[1], [0], [0], [1], [0, 0, 1, 1], [], []>} : vector<2x128xf32>, vector<128x128xf32>, vector<2x128xf32> -> vector<2x128xf32>
    %c128 = arith.constant 128 : index
    %c0_25 = arith.constant 0 : index
    %45 = vector.load %arg2[%c128, %c0_25] : memref<640x128xf32, #tpu.memory_space<vmem>>, vector<128x128xf32>
    %cst_26 = arith.constant dense<0.000000e+00> : vector<2x128xf32>
    %46 = tpu.matmul %15, %45, %cst_26 {dimension_numbers = #tpu.dot_dimension_numbers<[1], [0], [0], [1], [0, 0, 1, 1], [], []>} : vector<2x128xf32>, vector<128x128xf32>, vector<2x128xf32> -> vector<2x128xf32>
    %47 = arith.addf %44, %46 : vector<2x128xf32>
    %c256 = arith.constant 256 : index
    %c0_27 = arith.constant 0 : index
    %48 = vector.load %arg2[%c256, %c0_27] : memref<640x128xf32, #tpu.memory_space<vmem>>, vector<128x128xf32>
    %cst_28 = arith.constant dense<0.000000e+00> : vector<2x128xf32>
    %49 = tpu.matmul %16, %48, %cst_28 {dimension_numbers = #tpu.dot_dimension_numbers<[1], [0], [0], [1], [0, 0, 1, 1], [], []>} : vector<2x128xf32>, vector<128x128xf32>, vector<2x128xf32> -> vector<2x128xf32>
    %50 = arith.addf %47, %49 : vector<2x128xf32>
    %c384 = arith.constant 384 : index
    %c0_29 = arith.constant 0 : index
    %51 = vector.load %arg2[%c384, %c0_29] : memref<640x128xf32, #tpu.memory_space<vmem>>, vector<128x128xf32>
    %cst_30 = arith.constant dense<0.000000e+00> : vector<2x128xf32>
    %52 = tpu.matmul %42, %51, %cst_30 {dimension_numbers = #tpu.dot_dimension_numbers<[1], [0], [0], [1], [0, 0, 1, 1], [], []>} : vector<2x128xf32>, vector<128x128xf32>, vector<2x128xf32> -> vector<2x128xf32>
    %53 = arith.addf %50, %52 : vector<2x128xf32>
    %c512 = arith.constant 512 : index
    %c0_31 = arith.constant 0 : index
    %54 = vector.load %arg2[%c512, %c0_31] : memref<640x128xf32, #tpu.memory_space<vmem>>, vector<128x128xf32>
    %cst_32 = arith.constant dense<0.000000e+00> : vector<2x128xf32>
    %55 = tpu.matmul %18, %54, %cst_32 {dimension_numbers = #tpu.dot_dimension_numbers<[1], [0], [0], [1], [0, 0, 1, 1], [], []>} : vector<2x128xf32>, vector<128x128xf32>, vector<2x128xf32> -> vector<2x128xf32>
    %56 = arith.addf %53, %55 : vector<2x128xf32>
    %c0_33 = arith.constant 0 : index
    %c0_34 = arith.constant 0 : index
    %57 = vector.load %arg3[%c0_33, %c0_34] : memref<1x128xf32, #tpu.memory_space<vmem>>, vector<1x128xf32>
    %58 = vector.broadcast %57 : vector<1x128xf32> to vector<2x128xf32>
    %59 = arith.addf %56, %58 : vector<2x128xf32>
    %cst_35 = arith.constant 0.000000e+00 : f32
    %60 = vector.broadcast %cst_35 : f32 to vector<2x128xf32>
    %61 = arith.maximumf %59, %60 : vector<2x128xf32>
    %c0_36 = arith.constant 0 : index
    %c0_37 = arith.constant 0 : index
    %62 = vector.load %arg4[%c0_36, %c0_37] : memref<2x128xf32, #tpu.memory_space<vmem>>, vector<2x128xf32>
    tpu.vector_store %arg4[%c0_36, %c0_37], %61 {strides = array<i32>} : memref<2x128xf32, #tpu.memory_space<vmem>>, vector<2x128xf32>,
    return
  }
  func.func @transform_0(%arg0: i32) -> (i32, i32, i32) {
    %c0_i32 = arith.constant 0 : i32
    %c0_i32_0 = arith.constant 0 : i32
    %c0_i32_1 = arith.constant 0 : i32
    return %c0_i32, %arg0, %c0_i32_0 : i32, i32, i32
  }
  func.func @transform_1(%arg0: i32) -> (i32, i32) {
    %c0_i32 = arith.constant 0 : i32
    %c0_i32_0 = arith.constant 0 : i32
    %c0_i32_1 = arith.constant 0 : i32
    return %c0_i32, %c0_i32_0 : i32, i32
  }
  func.func @transform_2(%arg0: i32) -> (i32, i32) {
    %c0_i32 = arith.constant 0 : i32
    %c0_i32_0 = arith.constant 0 : i32
    %c0_i32_1 = arith.constant 0 : i32
    return %c0_i32, %c0_i32_0 : i32, i32
  }
  func.func @transform_3(%arg0: i32) -> (i32, i32) {
    %c0_i32 = arith.constant 0 : i32
    %c0_i32_0 = arith.constant 0 : i32
    return %arg0, %c0_i32 : i32, i32
  }
}

</mosaic_0001>

<llo_original>
// kernel: tpu_custom_call.1
$region0: #{tpu_custom_call.1}
  #allocation0 [shape = 'u32[]', space=smem, size = 0x4, offset = 0x4, fixed_abs, tag = 'smem constant byte address 0x4 - core index']
  #allocation1 [shape = 'u32[144,128]{1,0:T(1,128)}', space=vmem, size = 0x12000, scoped, tag = 'internal scratch']
  %s0 = inlined_call_operand.hbm [shape: f32[4,2,128], index: 0, kind: input, shape index: {}]
  %s1 = inlined_call_operand.hbm [shape: f32[640,128], index: 1, kind: input, shape index: {}]
  %s2 = inlined_call_operand.vmem [shape: f32[1,128], index: 2, kind: input, shape index: {}]
  %s3 = inlined_call_operand.hbm [shape: f32[2,128], index: 3, kind: output, shape index: {}]
  %s4 = sld [smem:[#allocation0]]
  $region30: #{tpu_custom_call.1} parent=0
    _
  %s6 = ssub.s32 1, %s4
  %s7 = scalar_select 0, %s6, %s4
  $region1: #{tpu_custom_call.1} parent=0
    #allocation2 [shape = 'u8[4096]{0}', space=vmem, size = 0x1000, scoped, tag = 'input window, operand 0, single buffered']
    #allocation3 [shape = 's32[1]{0}', space=sflag, size = 0x4, scoped, tag = 'scoped memory for tpu_custom_call.1']
    #allocation4 [shape = 's32[1]{0}', space=sflag, size = 0x4, scoped, tag = 'scoped memory for tpu_custom_call.1']
    #allocation5 [shape = 'u8[327680]{0}', space=vmem, size = 0x50000, scoped, tag = 'input window, operand 1, single buffered']
    #allocation6 [shape = 's32[1]{0}', space=sflag, size = 0x4, scoped, tag = 'scoped memory for tpu_custom_call.1']
    #allocation7 [shape = 'u8[1024]{0}', space=vmem, size = 0x400, scoped, tag = 'output window, operand 0, single buffered']
    %8 = vsyncpa [#allocation3], 0
    %9 = vsyncpa [#allocation6], 0
    %10 = vsyncpa [#allocation4], 0
    // Predicated region
    $region2: #{tpu_custom_call.1} parent=1 // pred_check
      _
    $region3: #{tpu_custom_call.1} parent=1 // pred_check_branch
      %12 = sbr.rel (0) target = $region5
    $region4: #{tpu_custom_call.1} parent=1 // pred_region
      %s14 = ssub.s32 128, 128
      %15 = vsyncadd [#allocation3], %s14
      %s16 = sshll.u32 [#allocation2], 4
      %s17 = int_to_ptr.vmem [resolvable:$true] %s16
      %22 = dma.hbm_to_vmem [thread:$0]  %s0, 128, %s17, [#allocation3], 32, 32, 2
    $region5: #{tpu_custom_call.1} parent=1 // pred_fallthru
      _
    // Predicated region
    $region6: #{tpu_custom_call.1} parent=1 // pred_check
      _
    $region7: #{tpu_custom_call.1} parent=1 // pred_check_branch
      %24 = sbr.rel (0) target = $region9
    $region8: #{tpu_custom_call.1} parent=1 // pred_region
      %s26 = ssub.s32 10240, 10240
      %27 = vsyncadd [#allocation6], %s26
      %s28 = sshll.u32 [#allocation5], 4
      %s29 = int_to_ptr.vmem [resolvable:$true] %s28
      %34 = dma.hbm_to_vmem [thread:$0]  %s1, 10240, %s29, [#allocation6], 128, 128, 8
    $region9: #{tpu_custom_call.1} parent=1 // pred_fallthru
      _
    // Predicated region
    $region10: #{tpu_custom_call.1} parent=1 // pred_check
      _
    $region11: #{tpu_custom_call.1} parent=1 // pred_check_branch
      %36 = sbr.rel (0) target = $region13
    $region12: #{tpu_custom_call.1} parent=1 // pred_region
      _
    $region13: #{tpu_custom_call.1} parent=1 // pred_fallthru
      _
    // Predicated region
    $region14: #{tpu_custom_call.1} parent=1 // pred_check
      _
    $region15: #{tpu_custom_call.1} parent=1 // pred_check_branch
      %38 = sbr.rel (0) target = $region17
    $region16: #{tpu_custom_call.1} parent=1 // pred_region
      %39 = dma.done [#allocation3], 128
    $region17: #{tpu_custom_call.1} parent=1 // pred_fallthru
      _
    // Predicated region
    $region18: #{tpu_custom_call.1} parent=1 // pred_check
      _
    $region19: #{tpu_custom_call.1} parent=1 // pred_check_branch
      %41 = sbr.rel (0) target = $region21
    $region20: #{tpu_custom_call.1} parent=1 // pred_region
      %42 = dma.done [#allocation6], 10240
    $region21: #{tpu_custom_call.1} parent=1 // pred_fallthru
      _
    %v43 = vld [vmem:[#allocation2] sm:$0x3]
    %s44 = scalar_lea.vmem [#allocation2], 2
    %v45 = vld [vmem:[%s44] sm:$0x3]
    %v46 = vadd.f32 %v43, %v45
    %v47 = vmax.f32 %v43, %v45
    %v48 = vmin.f32 %v43, %v45
    %s49 = scalar_lea.vmem [#allocation2], 4
    %v50 = vld [vmem:[%s49] sm:$0x3]
    %v51 = vadd.f32 %v46, %v50
    %v52 = vmax.f32 %v47, %v50
    %v53 = vmin.f32 %v48, %v50
    %s54 = scalar_lea.vmem [#allocation2], 6
    %v55 = vld [vmem:[%s54] sm:$0x3]
    %v56 = vadd.f32 %v51, %v55
    %v57 = vmax.f32 %v52, %v55
    %v58 = vmin.f32 %v53, %v55
    %v59 = vmul.f32 %v56, 0.25
    %v60 = vsub.f32 %v43, %v59
    %v61 = vmul.f32 %v60, %v60
    %v62 = vadd.f32 %v61, 0.0
    %v63 = vsub.f32 %v45, %v59
    %v64 = vmul.f32 %v63, %v63
    %v65 = vadd.f32 %v62, %v64
    %v66 = vsub.f32 %v50, %v59
    %v67 = vmul.f32 %v66, %v66
    %v68 = vadd.f32 %v65, %v67
    %v69 = vsub.f32 %v55, %v59
    %v70 = vmul.f32 %v69, %v69
    %v71 = vadd.f32 %v68, %v70
    %v72 = vmul.f32 %v71, 0.33333334
    %v73 = vrsqrt.pop %v72
    %v74 = vmul.f32 %v72, %v73
    %vm75 = vcmp.eq.f32.partialorder %v72, inf
    %v76 = vsel %vm75, %v72, %v74
    %vm77 = vcmp.eq.f32.partialorder %v72, 0.0
    %v78 = vand.u32 %v72, 2147483648
    %v79 = vsel %vm77, %v78, %v76
    %v80 = vld [vmem:[#allocation5] sm:$0xff]
    %v81 = vld [vmem:[#allocation5 + $0x8] sm:$0xff]
    %v82 = vld [vmem:[#allocation5 + $0x10] sm:$0xff]
    %v83 = vld [vmem:[#allocation5 + $0x18] sm:$0xff]
    %v84 = vld [vmem:[#allocation5 + $0x20] sm:$0xff]
    %v85 = vld [vmem:[#allocation5 + $0x28] sm:$0xff]
    %v86 = vld [vmem:[#allocation5 + $0x30] sm:$0xff]
    %v87 = vld [vmem:[#allocation5 + $0x38] sm:$0xff]
    %v88 = vld [vmem:[#allocation5 + $0x40] sm:$0xff]
    %v89 = vld [vmem:[#allocation5 + $0x48] sm:$0xff]
    %v90 = vld [vmem:[#allocation5 + $0x50] sm:$0xff]
    %v91 = vld [vmem:[#allocation5 + $0x58] sm:$0xff]
    %v92 = vld [vmem:[#allocation5 + $0x60] sm:$0xff]
    %v93 = vld [vmem:[#allocation5 + $0x68] sm:$0xff]
    %v94 = vld [vmem:[#allocation5 + $0x70] sm:$0xff]
    %v95 = vld [vmem:[#allocation5 + $0x78] sm:$0xff]
    %v96 = vld [vmem:[#allocation5 + $0x80] sm:$0xff]
    %v97 = vld [vmem:[#allocation5 + $0x88] sm:$0xff]
    %v98 = vld [vmem:[#allocation5 + $0x90] sm:$0xff]
    %v99 = vld [vmem:[#allocation5 + $0x98] sm:$0xff]
    %v100 = vld [vmem:[#allocation5 + $0xa0] sm:$0xff]
    %v101 = vld [vmem:[#allocation5 + $0xa8] sm:$0xff]
    %v102 = vld [vmem:[#allocation5 + $0xb0] sm:$0xff]
    %v103 = vld [vmem:[#allocation5 + $0xb8] sm:$0xff]
    %v104 = vld [vmem:[#allocation5 + $0xc0] sm:$0xff]
    %v105 = vld [vmem:[#allocation5 + $0xc8] sm:$0xff]
    %v106 = vld [vmem:[#allocation5 + $0xd0] sm:$0xff]
    %v107 = vld [vmem:[#allocation5 + $0xd8] sm:$0xff]
    %v108 = vld [vmem:[#allocation5 + $0xe0] sm:$0xff]
    %v109 = vld [vmem:[#allocation5 + $0xe8] sm:$0xff]
    %v110 = vld [vmem:[#allocation5 + $0xf0] sm:$0xff]
    %v111 = vld [vmem:[#allocation5 + $0xf8] sm:$0xff]
    %112 = vmatprep.subr.mxu0 0.0
    %113 = vmatpush1.msra.mxu0 %v96
    %114 = vmatprep.subr.mxu0 0.0
    %115 = vmatpush1.msra.mxu0 %v97
    %116 = vmatprep.subr.mxu0 0.0
    %117 = vmatpush1.msra.mxu0 %v98
    %118 = vmatprep.subr.mxu0 0.0
    %119 = vmatpush1.msra.mxu0 %v99
    %120 = vmatprep.subr.mxu0 0.0
    %121 = vmatpush1.msra.mxu0 %v100
    %122 = vmatprep.subr.mxu0 0.0
    %123 = vmatpush1.msra.mxu0 %v101
    %124 = vmatprep.subr.mxu0 0.0
    %125 = vmatpush1.msra.mxu0 %v102
    %126 = vmatprep.subr.mxu0 0.0
    %127 = vmatpush1.msra.mxu0 %v103
    %128 = vmatprep.subr.mxu0 0.0
    %129 = vmatpush1.msra.mxu0 %v104
    %130 = vmatprep.subr.mxu0 0.0
    %131 = vmatpush1.msra.mxu0 %v105
    %132 = vmatprep.subr.mxu0 0.0
    %133 = vmatpush1.msra.mxu0 %v106
    %134 = vmatprep.subr.mxu0 0.0
    %135 = vmatpush1.msra.mxu0 %v107
    %136 = vmatprep.subr.mxu0 0.0
    %137 = vmatpush1.msra.mxu0 %v108
    %138 = vmatprep.subr.mxu0 0.0
    %139 = vmatpush1.msra.mxu0 %v109
    %140 = vmatprep.subr.mxu0 0.0
    %141 = vmatpush1.msra.mxu0 %v110
    %142 = vmatprep.subr.mxu0 0.0
    %143 = vmatpush1.msra.mxu0 %v111
    %144 = vmatprep.subr.mxu0 0.0
    %145 = vmatpush1.msra.mxu0 0.0
    %146 = vmatprep.subr.mxu0 0.0
    %147 = vmatpush1.msra.mxu0 0.0
    %148 = vmatprep.subr.mxu0 0.0
    %149 = vmatpush1.msra.mxu0 0.0
    %150 = vmatprep.subr.mxu0 0.0
    %151 = vmatpush1.msra.mxu0 0.0
    %152 = vmatprep.subr.mxu0 0.0
    %153 = vmatpush1.msra.mxu0 0.0
    %154 = vmatprep.subr.mxu0 0.0
    %155 = vmatpush1.msra.mxu0 0.0
    %156 = vmatprep.subr.mxu0 0.0
    %157 = vmatpush1.msra.mxu0 0.0
    %158 = vmatprep.subr.mxu0 0.0
    %159 = vmatpush1.msra.mxu0 0.0
    %160 = vmatprep.subr.mxu0 0.0
    %161 = vmatpush1.msra.mxu0 0.0
    %162 = vmatprep.subr.mxu0 0.0
    %163 = vmatpush1.msra.mxu0 0.0
    %164 = vmatprep.subr.mxu0 0.0
    %165 = vmatpush1.msra.mxu0 0.0
    %166 = vmatprep.subr.mxu0 0.0
    %167 = vmatpush1.msra.mxu0 0.0
    %168 = vmatprep.subr.mxu0 0.0
    %169 = vmatpush1.msra.mxu0 0.0
    %170 = vmatprep.subr.mxu0 0.0
    %171 = vmatpush1.msra.mxu0 0.0
    %172 = vmatprep.subr.mxu0 0.0
    %173 = vmatpush1.msra.mxu0 0.0
    %174 = vmatprep.subr.mxu0 0.0
    %175 = vmatpush1.msra.mxu0 0.0
    %176 = vmatprep.mubr.f32.mxu0 0.0
    %177 = vmatmul.mubr.f32.gmra.mrb[0].mxu0 %v57
    %v178 = vpop.f32.mrb[0].mxu0
    %v179 = vadd.f32 0.0, %v178
    %v180 = vpop.f32.mrb[0].mxu0
    %181 = vdwg.mxu0
    %182 = vmatprep.subr.mxu0 0.0
    %183 = vmatpush1.msra.mxu0 %v80
    %184 = vmatprep.subr.mxu0 0.0
    %185 = vmatpush1.msra.mxu0 %v81
    %186 = vmatprep.subr.mxu0 0.0
    %187 = vmatpush1.msra.mxu0 %v82
    %188 = vmatprep.subr.mxu0 0.0
    %189 = vmatpush1.msra.mxu0 %v83
    %190 = vmatprep.subr.mxu0 0.0
    %191 = vmatpush1.msra.mxu0 %v84
    %192 = vmatprep.subr.mxu0 0.0
    %193 = vmatpush1.msra.mxu0 %v85
    %194 = vmatprep.subr.mxu0 0.0
    %195 = vmatpush1.msra.mxu0 %v86
    %196 = vmatprep.subr.mxu0 0.0
    %197 = vmatpush1.msra.mxu0 %v87
    %198 = vmatprep.subr.mxu0 0.0
    %199 = vmatpush1.msra.mxu0 %v88
    %200 = vmatprep.subr.mxu0 0.0
    %201 = vmatpush1.msra.mxu0 %v89
    %202 = vmatprep.subr.mxu0 0.0
    %203 = vmatpush1.msra.mxu0 %v90
    %204 = vmatprep.subr.mxu0 0.0
    %205 = vmatpush1.msra.mxu0 %v91
    %206 = vmatprep.subr.mxu0 0.0
    %207 = vmatpush1.msra.mxu0 %v92
    %208 = vmatprep.subr.mxu0 0.0
    %209 = vmatpush1.msra.mxu0 %v93
    %210 = vmatprep.subr.mxu0 0.0
    %211 = vmatpush1.msra.mxu0 %v94
    %212 = vmatprep.subr.mxu0 0.0
    %213 = vmatpush1.msra.mxu0 %v95
    %214 = vmatprep.subr.mxu0 0.0
    %215 = vmatpush1.msra.mxu0 0.0
    %216 = vmatprep.subr.mxu0 0.0
    %217 = vmatpush1.msra.mxu0 0.0
    %218 = vmatprep.subr.mxu0 0.0
    %219 = vmatpush1.msra.mxu0 0.0
    %220 = vmatprep.subr.mxu0 0.0
    %221 = vmatpush1.msra.mxu0 0.0
    %222 = vmatprep.subr.mxu0 0.0
    %223 = vmatpush1.msra.mxu0 0.0
    %224 = vmatprep.subr.mxu0 0.0
    %225 = vmatpush1.msra.mxu0 0.0
    %226 = vmatprep.subr.mxu0 0.0
    %227 = vmatpush1.msra.mxu0 0.0
    %228 = vmatprep.subr.mxu0 0.0
    %229 = vmatpush1.msra.mxu0 0.0
    %230 = vmatprep.subr.mxu0 0.0
    %231 = vmatpush1.msra.mxu0 0.0
    %232 = vmatprep.subr.mxu0 0.0
    %233 = vmatpush1.msra.mxu0 0.0
    %234 = vmatprep.subr.mxu0 0.0
    %235 = vmatpush1.msra.mxu0 0.0
    %236 = vmatprep.subr.mxu0 0.0
    %237 = vmatpush1.msra.mxu0 0.0
    %238 = vmatprep.subr.mxu0 0.0
    %239 = vmatpush1.msra.mxu0 0.0
    %240 = vmatprep.subr.mxu0 0.0
    %241 = vmatpush1.msra.mxu0 0.0
    %242 = vmatprep.subr.mxu0 0.0
    %243 = vmatpush1.msra.mxu0 0.0
    %244 = vmatprep.subr.mxu0 0.0
    %245 = vmatpush1.msra.mxu0 0.0
    %246 = vmatprep.mubr.f32.mxu0 0.0
    %247 = vmatmul.mubr.f32.gmra.mrb[0].mxu0 %v56
    %v248 = vpop.f32.mrb[0].mxu0
    %v249 = vadd.f32 %v179, %v248
    %v250 = vpop.f32.mrb[0].mxu0
    %251 = vdwg.mxu0
    %v252 = vld [vmem:[#allocation5 + $0x100] sm:$0xff]
    %v253 = vld [vmem:[#allocation5 + $0x108] sm:$0xff]
    %v254 = vld [vmem:[#allocation5 + $0x110] sm:$0xff]
    %v255 = vld [vmem:[#allocation5 + $0x118] sm:$0xff]
    %v256 = vld [vmem:[#allocation5 + $0x120] sm:$0xff]
    %v257 = vld [vmem:[#allocation5 + $0x128] sm:$0xff]
    %v258 = vld [vmem:[#allocation5 + $0x130] sm:$0xff]
    %v259 = vld [vmem:[#allocation5 + $0x138] sm:$0xff]
    %v260 = vld [vmem:[#allocation5 + $0x140] sm:$0xff]
    %v261 = vld [vmem:[#allocation5 + $0x148] sm:$0xff]
    %v262 = vld [vmem:[#allocation5 + $0x150] sm:$0xff]
    %v263 = vld [vmem:[#allocation5 + $0x158] sm:$0xff]
    %v264 = vld [vmem:[#allocation5 + $0x160] sm:$0xff]
    %v265 = vld [vmem:[#allocation5 + $0x168] sm:$0xff]
    %v266 = vld [vmem:[#allocation5 + $0x170] sm:$0xff]
    %v267 = vld [vmem:[#allocation5 + $0x178] sm:$0xff]
    %268 = vmatprep.subr.mxu0 0.0
    %269 = vmatpush1.msra.mxu0 %v252
    %270 = vmatprep.subr.mxu0 0.0
    %271 = vmatpush1.msra.mxu0 %v253
    %272 = vmatprep.subr.mxu0 0.0
    %273 = vmatpush1.msra.mxu0 %v254
    %274 = vmatprep.subr.mxu0 0.0
    %275 = vmatpush1.msra.mxu0 %v255
    %276 = vmatprep.subr.mxu0 0.0
    %277 = vmatpush1.msra.mxu0 %v256
    %278 = vmatprep.subr.mxu0 0.0
    %279 = vmatpush1.msra.mxu0 %v257
    %280 = vmatprep.subr.mxu0 0.0
    %281 = vmatpush1.msra.mxu0 %v258
    %282 = vmatprep.subr.mxu0 0.0
    %283 = vmatpush1.msra.mxu0 %v259
    %284 = vmatprep.subr.mxu0 0.0
    %285 = vmatpush1.msra.mxu0 %v260
    %286 = vmatprep.subr.mxu0 0.0
    %287 = vmatpush1.msra.mxu0 %v261
    %288 = vmatprep.subr.mxu0 0.0
    %289 = vmatpush1.msra.mxu0 %v262
    %290 = vmatprep.subr.mxu0 0.0
    %291 = vmatpush1.msra.mxu0 %v263
    %292 = vmatprep.subr.mxu0 0.0
    %293 = vmatpush1.msra.mxu0 %v264
    %294 = vmatprep.subr.mxu0 0.0
    %295 = vmatpush1.msra.mxu0 %v265
    %296 = vmatprep.subr.mxu0 0.0
    %297 = vmatpush1.msra.mxu0 %v266
    %298 = vmatprep.subr.mxu0 0.0
    %299 = vmatpush1.msra.mxu0 %v267
    %300 = vmatprep.subr.mxu0 0.0
    %301 = vmatpush1.msra.mxu0 0.0
    %302 = vmatprep.subr.mxu0 0.0
    %303 = vmatpush1.msra.mxu0 0.0
    %304 = vmatprep.subr.mxu0 0.0
    %305 = vmatpush1.msra.mxu0 0.0
    %306 = vmatprep.subr.mxu0 0.0
    %307 = vmatpush1.msra.mxu0 0.0
    %308 = vmatprep.subr.mxu0 0.0
    %309 = vmatpush1.msra.mxu0 0.0
    %310 = vmatprep.subr.mxu0 0.0
    %311 = vmatpush1.msra.mxu0 0.0
    %312 = vmatprep.subr.mxu0 0.0
    %313 = vmatpush1.msra.mxu0 0.0
    %314 = vmatprep.subr.mxu0 0.0
    %315 = vmatpush1.msra.mxu0 0.0
    %316 = vmatprep.subr.mxu0 0.0
    %317 = vmatpush1.msra.mxu0 0.0
    %318 = vmatprep.subr.mxu0 0.0
    %319 = vmatpush1.msra.mxu0 0.0
    %320 = vmatprep.subr.mxu0 0.0
    %321 = vmatpush1.msra.mxu0 0.0
    %322 = vmatprep.subr.mxu0 0.0
    %323 = vmatpush1.msra.mxu0 0.0
    %324 = vmatprep.subr.mxu0 0.0
    %325 = vmatpush1.msra.mxu0 0.0
    %326 = vmatprep.subr.mxu0 0.0
    %327 = vmatpush1.msra.mxu0 0.0
    %328 = vmatprep.subr.mxu0 0.0
    %329 = vmatpush1.msra.mxu0 0.0
    %330 = vmatprep.subr.mxu0 0.0
    %331 = vmatpush1.msra.mxu0 0.0
    %332 = vmatprep.mubr.f32.mxu0 0.0
    %333 = vmatmul.mubr.f32.gmra.mrb[0].mxu0 %v58
    %v334 = vpop.f32.mrb[0].mxu0
    %v335 = vadd.f32 0.0, %v334
    %v336 = vpop.f32.mrb[0].mxu0
    %337 = vdwg.mxu0
    %v338 = vadd.f32 %v249, %v335
    %v339 = vld [vmem:[#allocation5 + $0x180] sm:$0xff]
    %v340 = vld [vmem:[#allocation5 + $0x188] sm:$0xff]
    %v341 = vld [vmem:[#allocation5 + $0x190] sm:$0xff]
    %v342 = vld [vmem:[#allocation5 + $0x198] sm:$0xff]
    %v343 = vld [vmem:[#allocation5 + $0x1a0] sm:$0xff]
    %v344 = vld [vmem:[#allocation5 + $0x1a8] sm:$0xff]
    %v345 = vld [vmem:[#allocation5 + $0x1b0] sm:$0xff]
    %v346 = vld [vmem:[#allocation5 + $0x1b8] sm:$0xff]
    %v347 = vld [vmem:[#allocation5 + $0x1c0] sm:$0xff]
    %v348 = vld [vmem:[#allocation5 + $0x1c8] sm:$0xff]
    %v349 = vld [vmem:[#allocation5 + $0x1d0] sm:$0xff]
    %v350 = vld [vmem:[#allocation5 + $0x1d8] sm:$0xff]
    %v351 = vld [vmem:[#allocation5 + $0x1e0] sm:$0xff]
    %v352 = vld [vmem:[#allocation5 + $0x1e8] sm:$0xff]
    %v353 = vld [vmem:[#allocation5 + $0x1f0] sm:$0xff]
    %v354 = vld [vmem:[#allocation5 + $0x1f8] sm:$0xff]
    %355 = vmatprep.subr.mxu0 0.0
    %356 = vmatpush1.msra.mxu0 %v339
    %357 = vmatprep.subr.mxu0 0.0
    %358 = vmatpush1.msra.mxu0 %v340
    %359 = vmatprep.subr.mxu0 0.0
    %360 = vmatpush1.msra.mxu0 %v341
    %361 = vmatprep.subr.mxu0 0.0
    %362 = vmatpush1.msra.mxu0 %v342
    %363 = vmatprep.subr.mxu0 0.0
    %364 = vmatpush1.msra.mxu0 %v343
    %365 = vmatprep.subr.mxu0 0.0
    %366 = vmatpush1.msra.mxu0 %v344
    %367 = vmatprep.subr.mxu0 0.0
    %368 = vmatpush1.msra.mxu0 %v345
    %369 = vmatprep.subr.mxu0 0.0
    %370 = vmatpush1.msra.mxu0 %v346
    %371 = vmatprep.subr.mxu0 0.0
    %372 = vmatpush1.msra.mxu0 %v347
    %373 = vmatprep.subr.mxu0 0.0
    %374 = vmatpush1.msra.mxu0 %v348
    %375 = vmatprep.subr.mxu0 0.0
    %376 = vmatpush1.msra.mxu0 %v349
    %377 = vmatprep.subr.mxu0 0.0
    %378 = vmatpush1.msra.mxu0 %v350
    %379 = vmatprep.subr.mxu0 0.0
    %380 = vmatpush1.msra.mxu0 %v351
    %381 = vmatprep.subr.mxu0 0.0
    %382 = vmatpush1.msra.mxu0 %v352
    %383 = vmatprep.subr.mxu0 0.0
    %384 = vmatpush1.msra.mxu0 %v353
    %385 = vmatprep.subr.mxu0 0.0
    %386 = vmatpush1.msra.mxu0 %v354
    %387 = vmatprep.subr.mxu0 0.0
    %388 = vmatpush1.msra.mxu0 0.0
    %389 = vmatprep.subr.mxu0 0.0
    %390 = vmatpush1.msra.mxu0 0.0
    %391 = vmatprep.subr.mxu0 0.0
    %392 = vmatpush1.msra.mxu0 0.0
    %393 = vmatprep.subr.mxu0 0.0
    %394 = vmatpush1.msra.mxu0 0.0
    %395 = vmatprep.subr.mxu0 0.0
    %396 = vmatpush1.msra.mxu0 0.0
    %397 = vmatprep.subr.mxu0 0.0
    %398 = vmatpush1.msra.mxu0 0.0
    %399 = vmatprep.subr.mxu0 0.0
    %400 = vmatpush1.msra.mxu0 0.0
    %401 = vmatprep.subr.mxu0 0.0
    %402 = vmatpush1.msra.mxu0 0.0
    %403 = vmatprep.subr.mxu0 0.0
    %404 = vmatpush1.msra.mxu0 0.0
    %405 = vmatprep.subr.mxu0 0.0
    %406 = vmatpush1.msra.mxu0 0.0
    %407 = vmatprep.subr.mxu0 0.0
    %408 = vmatpush1.msra.mxu0 0.0
    %409 = vmatprep.subr.mxu0 0.0
    %410 = vmatpush1.msra.mxu0 0.0
    %411 = vmatprep.subr.mxu0 0.0
    %412 = vmatpush1.msra.mxu0 0.0
    %413 = vmatprep.subr.mxu0 0.0
    %414 = vmatpush1.msra.mxu0 0.0
    %415 = vmatprep.subr.mxu0 0.0
    %416 = vmatpush1.msra.mxu0 0.0
    %417 = vmatprep.subr.mxu0 0.0
    %418 = vmatpush1.msra.mxu0 0.0
    %419 = vmatprep.mubr.f32.mxu0 0.0
    %420 = vmatmul.mubr.f32.gmra.mrb[0].mxu0 %v79
    %v421 = vpop.f32.mrb[0].mxu0
    %v422 = vadd.f32 0.0, %v421
    %v423 = vpop.f32.mrb[0].mxu0
    %424 = vdwg.mxu0
    %v425 = vadd.f32 %v338, %v422
    %v426 = vld [vmem:[#allocation5 + $0x200] sm:$0xff]
    %v427 = vld [vmem:[#allocation5 + $0x208] sm:$0xff]
    %v428 = vld [vmem:[#allocation5 + $0x210] sm:$0xff]
    %v429 = vld [vmem:[#allocation5 + $0x218] sm:$0xff]
    %v430 = vld [vmem:[#allocation5 + $0x220] sm:$0xff]
    %v431 = vld [vmem:[#allocation5 + $0x228] sm:$0xff]
    %v432 = vld [vmem:[#allocation5 + $0x230] sm:$0xff]
    %v433 = vld [vmem:[#allocation5 + $0x238] sm:$0xff]
    %v434 = vld [vmem:[#allocation5 + $0x240] sm:$0xff]
    %v435 = vld [vmem:[#allocation5 + $0x248] sm:$0xff]
    %v436 = vld [vmem:[#allocation5 + $0x250] sm:$0xff]
    %v437 = vld [vmem:[#allocation5 + $0x258] sm:$0xff]
    %v438 = vld [vmem:[#allocation5 + $0x260] sm:$0xff]
    %v439 = vld [vmem:[#allocation5 + $0x268] sm:$0xff]
    %v440 = vld [vmem:[#allocation5 + $0x270] sm:$0xff]
    %v441 = vld [vmem:[#allocation5 + $0x278] sm:$0xff]
    %442 = vmatprep.subr.mxu0 0.0
    %443 = vmatpush1.msra.mxu0 %v426
    %444 = vmatprep.subr.mxu0 0.0
    %445 = vmatpush1.msra.mxu0 %v427
    %446 = vmatprep.subr.mxu0 0.0
    %447 = vmatpush1.msra.mxu0 %v428
    %448 = vmatprep.subr.mxu0 0.0
    %449 = vmatpush1.msra.mxu0 %v429
    %450 = vmatprep.subr.mxu0 0.0
    %451 = vmatpush1.msra.mxu0 %v430
    %452 = vmatprep.subr.mxu0 0.0
    %453 = vmatpush1.msra.mxu0 %v431
    %454 = vmatprep.subr.mxu0 0.0
    %455 = vmatpush1.msra.mxu0 %v432
    %456 = vmatprep.subr.mxu0 0.0
    %457 = vmatpush1.msra.mxu0 %v433
    %458 = vmatprep.subr.mxu0 0.0
    %459 = vmatpush1.msra.mxu0 %v434
    %460 = vmatprep.subr.mxu0 0.0
    %461 = vmatpush1.msra.mxu0 %v435
    %462 = vmatprep.subr.mxu0 0.0
    %463 = vmatpush1.msra.mxu0 %v436
    %464 = vmatprep.subr.mxu0 0.0
    %465 = vmatpush1.msra.mxu0 %v437
    %466 = vmatprep.subr.mxu0 0.0
    %467 = vmatpush1.msra.mxu0 %v438
    %468 = vmatprep.subr.mxu0 0.0
    %469 = vmatpush1.msra.mxu0 %v439
    %470 = vmatprep.subr.mxu0 0.0
    %471 = vmatpush1.msra.mxu0 %v440
    %472 = vmatprep.subr.mxu0 0.0
    %473 = vmatpush1.msra.mxu0 %v441
    %474 = vmatprep.subr.mxu0 0.0
    %475 = vmatpush1.msra.mxu0 0.0
    %476 = vmatprep.subr.mxu0 0.0
    %477 = vmatpush1.msra.mxu0 0.0
    %478 = vmatprep.subr.mxu0 0.0
    %479 = vmatpush1.msra.mxu0 0.0
    %480 = vmatprep.subr.mxu0 0.0
    %481 = vmatpush1.msra.mxu0 0.0
    %482 = vmatprep.subr.mxu0 0.0
    %483 = vmatpush1.msra.mxu0 0.0
    %484 = vmatprep.subr.mxu0 0.0
    %485 = vmatpush1.msra.mxu0 0.0
    %486 = vmatprep.subr.mxu0 0.0
    %487 = vmatpush1.msra.mxu0 0.0
    %488 = vmatprep.subr.mxu0 0.0
    %489 = vmatpush1.msra.mxu0 0.0
    %490 = vmatprep.subr.mxu0 0.0
    %491 = vmatpush1.msra.mxu0 0.0
    %492 = vmatprep.subr.mxu0 0.0
    %493 = vmatpush1.msra.mxu0 0.0
    %494 = vmatprep.subr.mxu0 0.0
    %495 = vmatpush1.msra.mxu0 0.0
    %496 = vmatprep.subr.mxu0 0.0
    %497 = vmatpush1.msra.mxu0 0.0
    %498 = vmatprep.subr.mxu0 0.0
    %499 = vmatpush1.msra.mxu0 0.0
    %500 = vmatprep.subr.mxu0 0.0
    %501 = vmatpush1.msra.mxu0 0.0
    %502 = vmatprep.subr.mxu0 0.0
    %503 = vmatpush1.msra.mxu0 0.0
    %504 = vmatprep.subr.mxu0 0.0
    %505 = vmatpush1.msra.mxu0 0.0
    %506 = vmatprep.mubr.f32.mxu0 0.0
    %507 = vmatmul.mubr.f32.gmra.mrb[0].mxu0 %v59
    %v508 = vpop.f32.mrb[0].mxu0
    %v509 = vadd.f32 0.0, %v508
    %v510 = vpop.f32.mrb[0].mxu0
    %511 = vdwg.mxu0
    %v512 = vadd.f32 %v425, %v509
    %v513 = vld [vmem:[%s2] sm:$0x1]
    %v515 = vlaneseq
    %v516 = vshrl.u32 %v515, 7
    %v517 = vsub.s32 0, %v516
    %v518 = vrot.slane %v513, %v517
    %v520 = vadd.f32 %v512, %v518
    %v521 = vmax.f32 %v520, 0.0
    %522 = vst [vmem:[#allocation7] sm:$0x3] %v521
    // Predicated region
    $region22: #{tpu_custom_call.1} parent=1 // pred_check
      _
    $region23: #{tpu_custom_call.1} parent=1 // pred_check_branch
      %524 = sbr.rel (0) target = $region25
    $region24: #{tpu_custom_call.1} parent=1 // pred_region
      %s526 = ssub.s32 32, 32
      %527 = vsyncadd [#allocation4], %s526
      %s529 = sshll.u32 [#allocation7], 4
      %s530 = int_to_ptr.vmem [resolvable:$true] %s529
      %532 = dma.vmem_to_hbm [thread:$0]  %s530, 32, %s3, [#allocation4]
    $region25: #{tpu_custom_call.1} parent=1 // pred_fallthru
      _
    // Predicated region
    $region26: #{tpu_custom_call.1} parent=1 // pred_check
      _
    $region27: #{tpu_custom_call.1} parent=1 // pred_check_branch
      %534 = sbr.rel (0) target = $region29
    $region28: #{tpu_custom_call.1} parent=1 // pred_region
      %535 = dma.done [#allocation4], 32
    $region29: #{tpu_custom_call.1} parent=1 // pred_fallthru
      _
    %536 = vsyncpa [#allocation3], 1
    %537 = vsyncpa [#allocation6], 1
    %538 = vsyncpa [#allocation4], 1

</llo_original>
